<compile_context>
chip_gen: v6e
topology: v6e:2x2x1
jax: 0.10.0
libtpu: 0.0.40
codegen_flags: <defaults>
</compile_context>

<pallas_src>
import functools

import jax
import jax.numpy as jnp
from jax import lax
from jax.experimental import pallas as pl
from jax.experimental.pallas import tpu as pltpu


# ----------------------------- Kernels ---------------------------------------

def _mean_small_kernel(x_ref, y_ref, o_ref, *, elem_fn):
    """Single-block path: mean over the whole tensor of elem_fn(x - y)."""
    d = x_ref[...].astype(jnp.float32) - y_ref[...].astype(jnp.float32)
    o_ref[...] = jnp.mean(elem_fn(d), keepdims=True)             # (1, 1)


def _mean_tiled_kernel(x_ref, y_ref, o_ref, *, elem_fn, tile_b, tile_d,
                       n_rows, n_cols):
    """Grid = (n_d ["parallel"], n_b ["arbitrary"]).

    The (8, tile_d) output block's index depends only on the D-chunk, so it
    stays resident in VMEM across the whole row sweep and doubles as the f32
    accumulator.  Rows fold into 8 sublanes with pure VALU adds (no per-step
    XLU reduce, no per-step divide).
    """
    di = pl.program_id(0)
    bi = pl.program_id(1)

    @pl.when(bi == 0)
    def _init():
        o_ref[...] = jnp.zeros_like(o_ref)

    x = x_ref[...].astype(jnp.float32)
    y = y_ref[...].astype(jnp.float32)
    vals = elem_fn(x - y)                                        # (tile_b, tile_d)

    row0 = bi * tile_b
    col0 = di * tile_d
    ragged = jnp.logical_or(row0 + tile_b > n_rows, col0 + tile_d > n_cols)

    @pl.when(jnp.logical_not(ragged))
    def _interior():                                             # common case: no mask
        o_ref[...] += vals.reshape(tile_b // 8, 8, tile_d).sum(axis=0)

    @pl.when(ragged)
    def _boundary():                                             # mask padded rows/lanes
        rows = lax.broadcasted_iota(jnp.int32, (tile_b, 1), 0) + row0
        cols = lax.broadcasted_iota(jnp.int32, (1, tile_d), 1) + col0
        keep = jnp.logical_and(rows < n_rows, cols < n_cols)
        masked = jnp.where(keep, vals, 0.0)
        o_ref[...] += masked.reshape(tile_b // 8, 8, tile_d).sum(axis=0)


def _cosine_kernel(x_ref, y_ref, o_ref):
    """1 - cosine_similarity(x, y, dim=1, eps=1e-8), one value per row."""
    x = x_ref[...].astype(jnp.float32)
    y = y_ref[...].astype(jnp.float32)
    dot = jnp.sum(x * y, axis=1, keepdims=True)                  # (tile_b, 1)
    sxx = jnp.sum(x * x, axis=1, keepdims=True)
    syy = jnp.sum(y * y, axis=1, keepdims=True)
    # 1/max(||x||*||y||, 1e-8) == rsqrt(max(sxx*syy, 1e-16)) -- one EUP rsqrt.
    inv = lax.rsqrt(jnp.maximum(sxx * syy, 1e-16))
    o_ref[...] = 1.0 - dot * inv


# ----------------------------- Tiling policy ----------------------------------

_SMALL_BYTES = 1 << 20     # per-input bytes; at/below this: single VMEM block, grid=()
_FORCE_TILES = None        # testing hook: (tile_b, tile_d) forces the tiled mse/mae path

_VMEM_SPEC = pl.BlockSpec(memory_space=pltpu.MemorySpace.VMEM)


def _round_down(n, m):
    return n // m * m


@functools.lru_cache(maxsize=None)
def _vmem_limit_bytes():
    """Scoped-VMEM budget per generation (v7x: 48 of 64 MiB; v5e/v6e: 64 of 128)."""
    cap = 64 << 20                               # conservative fallback (v7x physical)
    try:
        cap = int(pltpu.get_tpu_info().vmem_capacity_bytes)
    except Exception:
        pass
    return min(cap * 3 // 4, 64 << 20)


def _tile_elems(itemsize, n_f32_temps):
    """Max per-input tile element count for the pipelined paths.

    Accounts for 2 inputs x 2 pipeline buffers (input dtype) plus the live
    full-tile f32 intermediates inside the kernel, with ~20% headroom.  This
    makes tiles as big as the generation's VMEM allows (fewer ~0.35 us
    per-step overheads) and gives bf16 inputs ~2x the rows of f32 for the same
    footprint.
    """
    per_elem = 4 * itemsize + 4 * n_f32_temps
    return (_vmem_limit_bytes() * 4 // 5) // per_elem


def _choose_tiles(B, D, itemsize, max_elems):
    """Pick (tile_b, tile_d).  Prefer full-D row tiles; fall back to lane tiling."""
    if _FORCE_TILES is not None:
        return _FORCE_TILES
    rows = max_elems // D
    if rows >= 32:
        tile_b = min(_round_down(rows, 32), max(32, _round_down(B, 32)), 8192)
        return tile_b, D
    # Rows too wide even for a 32-row full-D tile (huge D): tile lanes instead.
    tile_d = max(128, _round_down(max_elems // 32, 128))
    tile_d = min(tile_d, _round_down(D, 128))
    return 32, tile_d


# ----------------------------- Wrappers ---------------------------------------

def _mean_loss(elem_fn, x, y):
    """mean(elem_fn(x - y)) over all elements -> 0-d f32 scalar (like torch)."""
    if x.ndim == 1:
        x, y = x.reshape(1, -1), y.reshape(1, -1)
    elif x.ndim != 2:
        x, y = x.reshape(-1, x.shape[-1]), y.reshape(-1, y.shape[-1])
    B, D = x.shape
    itemsize = x.dtype.itemsize

    if _FORCE_TILES is None and (itemsize * B * D <= _SMALL_BYTES or B < 64):
        # TODO(synk): a tiny-batch x wider-than-VMEM row would need a D-tiled
        # small path; unrealistic for direction-loss embeddings, so not built.
        out = pl.pallas_call(
            functools.partial(_mean_small_kernel, elem_fn=elem_fn),
            out_shape=jax.ShapeDtypeStruct((1, 1), jnp.float32),
            in_specs=[_VMEM_SPEC, _VMEM_SPEC],
            out_specs=_VMEM_SPEC,
            compiler_params=pltpu.CompilerParams(
                vmem_limit_bytes=_vmem_limit_bytes()),
        )(x, y)
        return out[0, 0]

    # Worst case ~3 live full-tile f32 intermediates (x_f32, y_f32, diff/vals).
    tile_b, tile_d = _choose_tiles(B, D, itemsize, _tile_elems(itemsize, 3))
    n_b = pl.cdiv(B, tile_b)
    n_d = pl.cdiv(D, tile_d)

    partials = pl.pallas_call(
        functools.partial(_mean_tiled_kernel, elem_fn=elem_fn, tile_b=tile_b,
                          tile_d=tile_d, n_rows=B, n_cols=D),
        out_shape=jax.ShapeDtypeStruct((8, n_d * tile_d), jnp.float32),
        grid=(n_d, n_b),
        in_specs=[pl.BlockSpec((tile_b, tile_d), lambda di, bi: (bi, di)),
                  pl.BlockSpec((tile_b, tile_d), lambda di, bi: (bi, di))],
        out_specs=pl.BlockSpec((8, tile_d), lambda di, bi: (0, di)),
        compiler_params=pltpu.CompilerParams(
            # Row sweep accumulates into the resident output block -> "arbitrary";
            # distinct D-chunks are independent -> "parallel".
            # TODO(synk): pltpu.CORE_PARALLEL / pl.core_map for a true 2-TC row
            # split on multi-TensorCore parts (v7x).
            dimension_semantics=("parallel", "arbitrary"),
            vmem_limit_bytes=_vmem_limit_bytes(),
        ),
    )(x, y)
    # Tiny epilogue: reduce the (8, n_d*tile_d) partial sums and divide by the
    # TRUE element count (masked boundary rows/lanes contributed exactly zero).
    return jnp.sum(partials) / (B * D)


def _cosine_loss(x, y):
    """1 - cosine_similarity(x, y, dim=1, eps=1e-8) -> (B,) float32."""
    B, D = x.shape
    itemsize = x.dtype.itemsize

    if itemsize * B * D <= _SMALL_BYTES or B < 64:
        out = pl.pallas_call(
            _cosine_kernel,
            out_shape=jax.ShapeDtypeStruct((B, 1), jnp.float32),
            in_specs=[_VMEM_SPEC, _VMEM_SPEC],
            out_specs=_VMEM_SPEC,
            compiler_params=pltpu.CompilerParams(
                vmem_limit_bytes=_vmem_limit_bytes()),
        )(x, y)
        return out[:, 0]

    # Worst case ~4 live full-tile f32 intermediates (x_f32, y_f32, 2 products).
    tile_b, tile_d = _choose_tiles(B, D, itemsize, _tile_elems(itemsize, 4))
    if tile_d != D:
        # TODO(synk): D-chunked cosine (cross-chunk dot/norm accumulation) not built.
        raise NotImplementedError("cosine DirectionLoss: rows too wide for VMEM")
    n_b = pl.cdiv(B, tile_b)

    out = pl.pallas_call(
        _cosine_kernel,
        out_shape=jax.ShapeDtypeStruct((B, 1), jnp.float32),
        grid=(n_b,),
        in_specs=[pl.BlockSpec((tile_b, D), lambda i: (i, 0)),
                  pl.BlockSpec((tile_b, D), lambda i: (i, 0))],
        # (tile_b, 1) writeback is <1% of traffic; lane-dense transpose not worth it.
        out_specs=pl.BlockSpec((tile_b, 1), lambda i: (i, 0)),
        compiler_params=pltpu.CompilerParams(
            dimension_semantics=("parallel",),
            vmem_limit_bytes=_vmem_limit_bytes(),
        ),
    )(x, y)
    return out[:, 0]


class DirectionLoss:
    """JAX/Pallas port of the PyTorch DirectionLoss module (no parameters)."""

    _ELEM = {"mse": lambda d: d * d, "cosine": None, "mae": jnp.abs}

    def __init__(self, loss_type="mse"):
        self.loss_type = loss_type
        self._elem = self._ELEM[loss_type]       # KeyError for unknown, like torch

    def __call__(self, x, y):
        if self.loss_type == "cosine":
            return _cosine_loss(x, y)            # (B,)
        return _mean_loss(self._elem, x, y)      # scalar


# ----------------------------- Demo / self-check ------------------------------

def _refs(x, y):
    x32, y32 = x.astype(jnp.float32), y.astype(jnp.float32)
    mse = jnp.mean((x32 - y32) ** 2)
    mae = jnp.mean(jnp.abs(x32 - y32))
    dot = jnp.sum(x32 * y32, axis=1)
    nrm = jnp.linalg.norm(x32, axis=1) * jnp.linalg.norm(y32, axis=1)
    cos = 1.0 - dot / jnp.maximum(nrm, 1e-8)
    return mse, mae, cos


def _check(name, got, want, rtol=1e-4, atol=1e-5):
    assert jnp.allclose(got, want, rtol=rtol, atol=atol), (name, got, want)


if __name__ == "__main__":
    keys = jax.random.split(jax.random.PRNGKey(0), 6)

    # --- small path (single VMEM block, grid=()) : CLIP-embedding-like -------
    xs = jax.random.normal(keys[0], (8, 256), dtype=jnp.float32)
    ys = jax.random.normal(keys[1], (8, 256), dtype=jnp.float32)
    outs = (DirectionLoss("mse")(xs, ys), DirectionLoss("mae")(xs, ys),
            DirectionLoss("cosine")(xs, ys))
    jax.block_until_ready(outs)
    for n, g, w in zip(("mse", "mae", "cos"), outs, _refs(xs, ys)):
        _check("small-" + n, g, w)

    # --- tiled path (pipelined row tiles, ragged last tile) ------------------
    xl = jax.random.normal(keys[2], (2500, 512), dtype=jnp.float32)
    yl = jax.random.normal(keys[3], (2500, 512), dtype=jnp.float32)
    outl = (DirectionLoss("mse")(xl, yl), DirectionLoss("mae")(xl, yl),
            DirectionLoss("cosine")(xl, yl))
    jax.block_until_ready(outl)
    for n, g, w in zip(("mse", "mae", "cos"), outl, _refs(xl, yl)):
        _check("tiled-" + n, g, w)

    # --- bf16 inputs (dtype-aware tiles, f32 accumulation) -------------------
    xb, yb = xl.astype(jnp.bfloat16), yl.astype(jnp.bfloat16)
    mse_b = DirectionLoss("mse")(xb, yb)
    jax.block_until_ready(mse_b)
    _check("bf16-mse", mse_b,
           jnp.mean((xb.astype(jnp.float32) - yb.astype(jnp.float32)) ** 2))

    # --- forced D-tiled path (exercises lane + row boundary masking) ---------
    xf = jax.random.normal(keys[4], (250, 640), dtype=jnp.float32)
    yf = jax.random.normal(keys[5], (250, 640), dtype=jnp.float32)
    _FORCE_TILES = (64, 256)        # 4 ragged row tiles x 3 ragged lane chunks
    out_f = (DirectionLoss("mse")(xf, yf), DirectionLoss("mae")(xf, yf))
    jax.block_until_ready(out_f)
    _FORCE_TILES = None
    _check("dtiled-mse", out_f[0], jnp.mean((xf - yf) ** 2))
    _check("dtiled-mae", out_f[1], jnp.mean(jnp.abs(xf - yf)))

    print("KERNEL_OK")
</pallas_src>

<mosaic_0001>
module attributes {stable_mosaic.version = 11 : i64} {
  func.func @_mean_small_kernel(%arg0: memref<8x256xf32, #tpu.memory_space<vmem>>, %arg1: memref<8x256xf32, #tpu.memory_space<vmem>>, %arg2: memref<1x1xf32, #tpu.memory_space<vmem>>) attributes {dimension_semantics = [], scalar_prefetch = 0 : i64, scratch_operands = 0 : i64, tpu.core_type = #tpu.core_type<tc>} {
    %c0 = arith.constant 0 : index
    %c0_0 = arith.constant 0 : index
    %0 = vector.load %arg0[%c0, %c0_0] : memref<8x256xf32, #tpu.memory_space<vmem>>, vector<8x256xf32>
    %c0_1 = arith.constant 0 : index
    %c0_2 = arith.constant 0 : index
    %1 = vector.load %arg1[%c0_1, %c0_2] : memref<8x256xf32, #tpu.memory_space<vmem>>, vector<8x256xf32>
    %2 = arith.subf %0, %1 : vector<8x256xf32>
    %3 = arith.mulf %2, %2 : vector<8x256xf32>
    %4 = vector.shape_cast %3 : vector<8x256xf32> to vector<1x8x256xf32>
    %cst = arith.constant dense<0.000000e+00> : vector<1xf32>
    %5 = vector.multi_reduction <add>, %4, %cst [1, 2] : vector<1x8x256xf32> to vector<1xf32>
    %6 = vector.shape_cast %5 : vector<1xf32> to vector<1x1x1xf32>
    %7 = vector.extract %6[0, 0, 0] : f32 from vector<1x1x1xf32>
    %8 = vector.broadcast %7 : f32 to vector<1x1xf32>
    %cst_3 = arith.constant 2.048000e+03 : f32
    %9 = vector.broadcast %cst_3 : f32 to vector<1x1xf32>
    %10 = arith.divf %8, %9 : vector<1x1xf32>
    %c0_4 = arith.constant 0 : index
    %c0_5 = arith.constant 0 : index
    %11 = vector.load %arg2[%c0_4, %c0_5] : memref<1x1xf32, #tpu.memory_space<vmem>>, vector<1x1xf32>
    tpu.vector_store %arg2[%c0_4, %c0_5], %10 {strides = array<i32>} : memref<1x1xf32, #tpu.memory_space<vmem>>, vector<1x1xf32>,
    return
  }
}

</mosaic_0001>

<llo_original>
// kernel: tpu_custom_call.1
$region0: #{tpu_custom_call.1}
  #allocation0 [shape = 'u32[]', space=smem, size = 0x4, offset = 0x4, fixed_abs, tag = 'smem constant byte address 0x4 - core index']
  #allocation1 [shape = 'u32[144,128]{1,0:T(1,128)}', space=vmem, size = 0x12000, scoped, tag = 'internal scratch']
  %s0 = inlined_call_operand.hbm [shape: f32[8,256], index: 0, kind: input, shape index: {}]
  %s1 = inlined_call_operand.hbm [shape: f32[8,256], index: 1, kind: input, shape index: {}]
  %s2 = inlined_call_operand.hbm [shape: f32[1,1], index: 2, kind: output, shape index: {}]
  %s3 = sld [smem:[#allocation0]]
  $region26: #{tpu_custom_call.1} parent=0
    _
  %s5 = ssub.s32 1, %s3
  %s6 = scalar_select 0, %s5, %s3
  $region1: #{tpu_custom_call.1} parent=0
    #allocation2 [shape = 'u8[8192]{0}', space=vmem, size = 0x2000, scoped, tag = 'input window, operand 0, single buffered']
    #allocation3 [shape = 's32[1]{0}', space=sflag, size = 0x4, scoped, tag = 'scoped memory for tpu_custom_call.1']
    #allocation4 [shape = 's32[1]{0}', space=sflag, size = 0x4, scoped, tag = 'scoped memory for tpu_custom_call.1']
    #allocation5 [shape = 'u8[8192]{0}', space=vmem, size = 0x2000, scoped, tag = 'input window, operand 1, single buffered']
    #allocation6 [shape = 's32[1]{0}', space=sflag, size = 0x4, scoped, tag = 'scoped memory for tpu_custom_call.1']
    #allocation7 [shape = 'u8[512]{0}', space=vmem, size = 0x400, scoped, tag = 'output window, operand 0, single buffered']
    %7 = vsyncpa [#allocation3], 0
    %8 = vsyncpa [#allocation6], 0
    %9 = vsyncpa [#allocation4], 0
    // Predicated region
    $region2: #{tpu_custom_call.1} parent=1 // pred_check
      _
    $region3: #{tpu_custom_call.1} parent=1 // pred_check_branch
      %11 = sbr.rel (0) target = $region5
    $region4: #{tpu_custom_call.1} parent=1 // pred_region
      %s13 = ssub.s32 256, 256
      %14 = vsyncadd [#allocation3], %s13
      %s16 = sshll.u32 [#allocation2], 4
      %s17 = int_to_ptr.vmem [resolvable:$true] %s16
      %19 = dma.hbm_to_vmem [thread:$0]  %s0, 256, %s17, [#allocation3]
    $region5: #{tpu_custom_call.1} parent=1 // pred_fallthru
      _
    // Predicated region
    $region6: #{tpu_custom_call.1} parent=1 // pred_check
      _
    $region7: #{tpu_custom_call.1} parent=1 // pred_check_branch
      %21 = sbr.rel (0) target = $region9
    $region8: #{tpu_custom_call.1} parent=1 // pred_region
      %s23 = ssub.s32 256, 256
      %24 = vsyncadd [#allocation6], %s23
      %s26 = sshll.u32 [#allocation5], 4
      %s27 = int_to_ptr.vmem [resolvable:$true] %s26
      %29 = dma.hbm_to_vmem [thread:$0]  %s1, 256, %s27, [#allocation6]
    $region9: #{tpu_custom_call.1} parent=1 // pred_fallthru
      _
    // Predicated region
    $region10: #{tpu_custom_call.1} parent=1 // pred_check
      _
    $region11: #{tpu_custom_call.1} parent=1 // pred_check_branch
      %31 = sbr.rel (0) target = $region13
    $region12: #{tpu_custom_call.1} parent=1 // pred_region
      %32 = dma.done [#allocation3], 256
    $region13: #{tpu_custom_call.1} parent=1 // pred_fallthru
      _
    // Predicated region
    $region14: #{tpu_custom_call.1} parent=1 // pred_check
      _
    $region15: #{tpu_custom_call.1} parent=1 // pred_check_branch
      %34 = sbr.rel (0) target = $region17
    $region16: #{tpu_custom_call.1} parent=1 // pred_region
      %35 = dma.done [#allocation6], 256
    $region17: #{tpu_custom_call.1} parent=1 // pred_fallthru
      _
    %v36 = vld [vmem:[#allocation2] sm:$0xff]
    %v37 = vld [vmem:[#allocation2 + $0x8] sm:$0xff]
    %v38 = vld [vmem:[#allocation5] sm:$0xff]
    %v39 = vld [vmem:[#allocation5 + $0x8] sm:$0xff]
    %v40 = vsub.f32 %v36, %v38
    %v41 = vsub.f32 %v37, %v39
    %v42 = vmul.f32 %v40, %v40
    %v43 = vmul.f32 %v41, %v41
    %v44 = vadd.f32 %v42, %v43
    %45 = vadd.xlane.f32.xlu0 %v44
    %v46 = vpop.xlane.xlu0 %45
    %v47 = vrot.slane %v46, 4
    %v48 = vadd.f32 %v46, %v47
    %v49 = vrot.slane %v48, 2
    %v50 = vadd.f32 %v48, %v49
    %v51 = vrot.slane %v50, 1
    %v52 = vadd.f32 %v50, %v51
    %s53 = vtos %v52
    %v54 = vstv %s53
    %v55 = vrcp.pop 2048.0
    %v56 = vmul.f32 %v54, %v55
    %vm57 = vcmask 0
    %58 = vst.msk [vmem:[#allocation7] sm:$0x1] %vm57, %v56
    // Predicated region
    $region18: #{tpu_custom_call.1} parent=1 // pred_check
      _
    $region19: #{tpu_custom_call.1} parent=1 // pred_check_branch
      %60 = sbr.rel (0) target = $region21
    $region20: #{tpu_custom_call.1} parent=1 // pred_region
      %s62 = ssub.s32 16, 16
      %63 = vsyncadd [#allocation4], %s62
      %s65 = sshll.u32 [#allocation7], 4
      %s66 = int_to_ptr.vmem [resolvable:$true] %s65
      %68 = dma.vmem_to_hbm [thread:$0]  %s66, 16, %s2, [#allocation4]
    $region21: #{tpu_custom_call.1} parent=1 // pred_fallthru
      _
    // Predicated region
    $region22: #{tpu_custom_call.1} parent=1 // pred_check
      _
    $region23: #{tpu_custom_call.1} parent=1 // pred_check_branch
      %70 = sbr.rel (0) target = $region25
    $region24: #{tpu_custom_call.1} parent=1 // pred_region
      %71 = dma.done [#allocation4], 16
    $region25: #{tpu_custom_call.1} parent=1 // pred_fallthru
      _
    %72 = vsyncpa [#allocation3], 1
    %73 = vsyncpa [#allocation6], 1
    %74 = vsyncpa [#allocation4], 1

</llo_original>
